<compile_context>
chip_gen: v7x
topology: tpu7x:2x2x1
jax: 0.10.0
libtpu: 0.0.40
codegen_flags: <defaults>
</compile_context>

<pallas_src>
import functools

import jax
import jax.numpy as jnp
import numpy as np
from jax import lax
from jax.experimental import pallas as pl
from jax.experimental.pallas import tpu as pltpu

_SMALL_C_THRESHOLD = 8          # below this: unrolled VPU loop (sub-sublane-group C)
_MAX_BATCH_BLOCK = 8            # cap on batch items per block (bounds kernel unrolling)
_MAX_VMEM_LIMIT = 96 * 1024 * 1024   # never ask for more scoped VMEM than this
_MAX_BLOCK_BYTES = 8 * 1024 * 1024   # upper cap on a single x block


def _vmem_capacity_bytes() -> int:
    """Physical VMEM per TensorCore; falls back to the smallest current chip (v7x)."""
    try:
        cap = int(getattr(pltpu.get_tpu_info(), "vmem_capacity_bytes", 0))
        if cap > 0:
            return cap
    except Exception:
        pass
    return 64 * 1024 * 1024


def _build_window_matrix(channels: int, size: int) -> jnp.ndarray:
    """Simulate the exact PyTorch add/subtract loop -> 0/1 membership matrix M[c, j]."""
    pad = int((size - 1) / 2 + 1)
    pad_crop = channels if pad > channels else pad
    counts = []
    cur = [0] * channels
    for c in range(pad_crop):
        cur[c] += 1
    counts.append(list(cur))
    for c in range(1, channels):
        cur = list(counts[c - 1])
        if c < channels - pad + 1:
            cur[c + pad - 1] += 1
        if c > pad:
            cur[c - pad] -= 1
        counts.append(cur)
    return jnp.asarray(np.array(counts, dtype=np.float32))


def _scale_from_denom(denom, beta):
    """denom ** (-beta) with cheap EUP paths for the common betas (denom > 0)."""
    if beta == 0.75:
        r = lax.rsqrt(denom)        # denom^-0.5
        return r * jnp.sqrt(r)      # * denom^-0.25 -> denom^-0.75
    if beta == 0.5:
        return lax.rsqrt(denom)
    return jnp.exp(-beta * jnp.log(denom))   # generic fallback


def _lrn_kernel_mxu(x_ref, m_ref, o_ref, *, alpha, beta, k, size):
    """C >= 8: window sum as a (C,C)@(C,hw_tile) MXU matmul per batch item."""
    m = m_ref[...]
    for b in range(x_ref.shape[0]):           # bn <= _MAX_BATCH_BLOCK, static unroll
        x = x_ref[b].astype(jnp.float32)      # (C, hw_tile)
        sq = x * x
        # M entries are exactly 0/1; any MXU-pass rounding on ssum is attenuated by
        # alpha/size << 1 before the pow, so default matmul precision stays orders of
        # magnitude inside the verification tolerance (checked empirically below).
        ssum = jnp.dot(m, sq, preferred_element_type=jnp.float32)
        denom = ssum * (alpha / size) + k
        o_ref[b] = (x * _scale_from_denom(denom, beta)).astype(o_ref.dtype)


def _lrn_kernel_vpu(x_ref, o_ref, *, alpha, beta, k, size, channels):
    """C < 8: PyTorch add/subtract loop unrolled at trace time (VPU only)."""
    pad = int((size - 1) / 2 + 1)
    pad_crop = channels if pad > channels else pad
    for b in range(x_ref.shape[0]):           # bn <= _MAX_BATCH_BLOCK, static unroll
        x = x_ref[b].astype(jnp.float32)      # (C, hw_tile)
        sq = x * x
        cur = sq[0:1, :]
        for c in range(1, pad_crop):
            cur = cur + sq[c:c + 1, :]
        rows = [cur]
        for c in range(1, channels):
            cur = rows[c - 1]
            if c < channels - pad + 1:
                cur = cur + sq[c + pad - 1:c + pad, :]
            if c > pad:
                cur = cur - sq[c - pad:c - pad + 1, :]
            rows.append(cur)
        ssum = rows[0] if channels == 1 else jnp.concatenate(rows, axis=0)
        denom = ssum * (alpha / size) + k
        o_ref[b] = (x * _scale_from_denom(denom, beta)).astype(o_ref.dtype)


def _choose_tiling(n, channels, hw, dtype, target_block_bytes):
    """Pick (bn, hw_tile): lane-dense spatial tile + batch blocking, >=2 grid steps."""
    itemsize = jnp.dtype(dtype).itemsize
    sublane = 8 * max(1, 4 // itemsize)            # sublane packing for the input dtype
    cpad_in = -(-channels // sublane) * sublane    # padded channel rows (input dtype)
    cpad_f32 = -(-channels // 8) * 8               # padded rows of the f32 intermediates
    per_lane_bytes = max(cpad_in * itemsize, cpad_f32 * 4)

    lanes = max(128, target_block_bytes // max(per_lane_bytes, 1))
    hw_tile = hw if lanes >= hw else max(128, (lanes // 128) * 128)

    bn = 1
    if hw_tile == hw:
        # Small feature map: pack several batch items per block so the ~0.35us per
        # grid-step overhead is amortized.
        block_bytes = max(per_lane_bytes * hw, 1)
        bn = int(min(n, _MAX_BATCH_BLOCK, max(1, target_block_bytes // block_bytes)))

    # v7x megacore: guarantee >= 2 grid steps whenever the problem can be split so the
    # 'parallel' grid axes can shard across both TensorCores (also harmless on 1-TC chips).
    if pl.cdiv(n, bn) * pl.cdiv(hw, hw_tile) < 2:
        if hw >= 256:
            half = (hw + 1) // 2
            hw_tile = min(hw, ((half + 127) // 128) * 128)
        elif bn >= 2:
            bn = (bn + 1) // 2
    return bn, hw_tile


def spatial_cross_map_lrn(x, size, alpha=0.0001, beta=0.75, k=1.0):
    assert x.ndim == 3 or x.ndim == 4, "support only 3D or 4D input"
    is_batch = True
    if x.ndim == 3:
        x = x[None]
        is_batch = False
    N, C, H, W = x.shape
    HW = H * W
    xf = x.reshape(N, C, HW)
    itemsize = jnp.dtype(x.dtype).itemsize

    # Generation-aware budgets: ~48 MiB scoped VMEM on v7x (64 MiB physical), ~96 MiB on
    # v5e/v6e (128 MiB).  Blocks sized so double-buffered in+out plus the f32 upcast /
    # sq / ssum / scale intermediates stay comfortably inside that budget.
    vmem_limit = int(min(_MAX_VMEM_LIMIT, (_vmem_capacity_bytes() * 3) // 4))
    target_block_bytes = min(_MAX_BLOCK_BYTES, vmem_limit // 12)

    bn, hw_tile = _choose_tiling(N, C, HW, x.dtype, target_block_bytes)
    grid = (pl.cdiv(N, bn), pl.cdiv(HW, hw_tile))

    x_spec = pl.BlockSpec((bn, C, hw_tile), lambda i, s: (i, 0, s))
    out_spec = pl.BlockSpec((bn, C, hw_tile), lambda i, s: (i, 0, s))
    # TODO(synk): when HW < 128 (tiny feature maps) the output stores are lane-masked;
    # a lane-dense repack would need an NCHW->CNHW relayout in HBM, which costs more
    # than it saves for this HBM-bound kernel.

    compiler_params = pltpu.CompilerParams(
        dimension_semantics=("parallel", "parallel"),   # batch blocks + spatial tiles
        vmem_limit_bytes=vmem_limit,
    )
    bytes_accessed = 2 * N * C * HW * itemsize
    transcendentals = 2 * N * C * HW

    if C < _SMALL_C_THRESHOLD:
        kernel = functools.partial(
            _lrn_kernel_vpu, alpha=float(alpha), beta=float(beta), k=float(k),
            size=int(size), channels=C)
        out = pl.pallas_call(
            kernel,
            out_shape=jax.ShapeDtypeStruct((N, C, HW), x.dtype),
            grid=grid,
            in_specs=[x_spec],
            out_specs=out_spec,
            compiler_params=compiler_params,
            cost_estimate=pl.CostEstimate(
                flops=N * HW * C * (int(size) + 4),
                transcendentals=transcendentals,
                bytes_accessed=bytes_accessed),
        )(xf)
    else:
        M = _build_window_matrix(C, size)   # f32, entries exactly 0/1
        # TODO(synk): for very large C (>~512) a banded / rolled window sum would avoid
        # the O(C^2) dense matmul and M's VMEM footprint; dense is fine for typical LRN C.
        kernel = functools.partial(
            _lrn_kernel_mxu, alpha=float(alpha), beta=float(beta), k=float(k),
            size=int(size))
        out = pl.pallas_call(
            kernel,
            out_shape=jax.ShapeDtypeStruct((N, C, HW), x.dtype),
            grid=grid,
            in_specs=[x_spec, pl.BlockSpec((C, C), lambda i, s: (0, 0))],
            out_specs=out_spec,
            compiler_params=compiler_params,
            cost_estimate=pl.CostEstimate(
                flops=2 * N * C * C * HW + 4 * N * C * HW,
                transcendentals=transcendentals,
                bytes_accessed=bytes_accessed + C * C * 4),
        )(xf, M)

    out = out.reshape(N, C, H, W)
    if not is_batch:
        # torch.squeeze(output, 1): drop the channel dim only when it is 1 (literal
        # PyTorch semantics preserved, including the surviving leading batch dim).
        out = out[:, 0] if out.shape[1] == 1 else out
    return out


def _ref_lrn(x, size, alpha=0.0001, beta=0.75, k=1.0):
    """Pure-JAX port of the PyTorch forward, for verification."""
    is_batch = x.ndim == 4
    if not is_batch:
        x = x[None]
    sq = x * x
    pad = int((size - 1) / 2 + 1)
    C = x.shape[1]
    pad_crop = C if pad > C else pad
    cur = jnp.zeros_like(x[:, :1])
    for c in range(pad_crop):
        cur = cur + sq[:, c:c + 1]
    sums = [cur]
    for c in range(1, C):
        cur = sums[c - 1]
        if c < C - pad + 1:
            cur = cur + sq[:, c + pad - 1:c + pad]
        if c > pad:
            cur = cur - sq[:, c - pad:c - pad + 1]
        sums.append(cur)
    s = jnp.concatenate(sums, 1) * alpha / size + k
    out = x * jnp.power(s, -beta)
    if not is_batch:
        out = out[:, 0] if out.shape[1] == 1 else out
    return out


if __name__ == "__main__":
    key = jax.random.PRNGKey(0)
    size, alpha, beta, k = 5, 0.0001, 0.75, 1.0
    k1, k2, k3, k4 = jax.random.split(key, 4)

    # 1) Main 4D case (tiny C -> VPU path, batch-blocked + spatially split grid).
    x = jax.random.normal(key, (2, 4, 16, 16), dtype=jnp.float32)
    out = jax.block_until_ready(spatial_cross_map_lrn(x, size, alpha, beta, k))
    ref = jax.block_until_ready(_ref_lrn(x, size, alpha, beta, k))
    np.testing.assert_allclose(np.asarray(out), np.asarray(ref), rtol=1e-4, atol=1e-5)

    # 2) Mid-C case (C=16) exercising the MXU membership-matrix path with bn>1.
    x2 = jax.random.normal(k1, (2, 16, 16, 16), dtype=jnp.float32)
    out2 = jax.block_until_ready(spatial_cross_map_lrn(x2, size, alpha, beta, k))
    ref2 = jax.block_until_ready(_ref_lrn(x2, size, alpha, beta, k))
    np.testing.assert_allclose(np.asarray(out2), np.asarray(ref2), rtol=1e-4, atol=1e-5)

    # 3) Larger-C case (C=40) on the MXU path, N=1 (spatial split keeps 2 grid steps).
    x3 = jax.random.normal(k2, (1, 40, 16, 16), dtype=jnp.float32)
    out3 = jax.block_until_ready(spatial_cross_map_lrn(x3, size, alpha, beta, k))
    ref3 = jax.block_until_ready(_ref_lrn(x3, size, alpha, beta, k))
    np.testing.assert_allclose(np.asarray(out3), np.asarray(ref3), rtol=1e-4, atol=1e-5)

    # 4) 3D (unbatched) input path with tiny HW.
    x4 = jax.random.normal(k3, (4, 8, 8), dtype=jnp.float32)
    out4 = jax.block_until_ready(spatial_cross_map_lrn(x4, size, alpha, beta, k))
    ref4 = jax.block_until_ready(_ref_lrn(x4, size, alpha, beta, k))
    np.testing.assert_allclose(np.asarray(out4), np.asarray(ref4), rtol=1e-4, atol=1e-5)

    # 5) bf16 activations (halves HBM traffic; kernel computes in f32 internally).
    xb = jax.random.normal(k4, (2, 4, 16, 16), dtype=jnp.bfloat16)
    outb = jax.block_until_ready(spatial_cross_map_lrn(xb, size, alpha, beta, k))
    refb = jax.block_until_ready(_ref_lrn(xb.astype(jnp.float32), size, alpha, beta, k))
    np.testing.assert_allclose(np.asarray(outb).astype(np.float32), np.asarray(refb),
                               rtol=2e-2, atol=2e-2)

    print("KERNEL_OK")
</pallas_src>

<mosaic_0001>
module attributes {stable_mosaic.version = 11 : i64} {
  func.func @_lrn_kernel_vpu(%arg0: i32, %arg1: i32, %arg2: memref<2x4x128xf32, #tpu.memory_space<vmem>>, %arg3: memref<2x4x128xf32, #tpu.memory_space<vmem>>) attributes {dimension_semantics = [#tpu.dimension_semantics<parallel>, #tpu.dimension_semantics<parallel>], iteration_bounds = array<i64: 1, 2>, scalar_prefetch = 0 : i64, scratch_operands = 0 : i64, tpu.core_type = #tpu.core_type<tc>, window_params = [{transform_indices = @transform_0, window_bounds = array<i64: 2, 4, 128>}, {transform_indices = @transform_1, window_bounds = array<i64: 2, 4, 128>}]} {
    %c0 = arith.constant 0 : index
    %c0_0 = arith.constant 0 : index
    %c0_1 = arith.constant 0 : index
    %0 = vector.load %arg2[%c0, %c0_0, %c0_1] : memref<2x4x128xf32, #tpu.memory_space<vmem>>, vector<1x4x128xf32>
    %1 = vector.shape_cast %0 : vector<1x4x128xf32> to vector<4x128xf32>
    %2 = arith.mulf %1, %1 : vector<4x128xf32>
    %3 = vector.extract_strided_slice %2 {offsets = [0, 0], sizes = [1, 128], strides = [1, 1]} : vector<4x128xf32> to vector<1x128xf32>
    %4 = vector.extract_strided_slice %2 {offsets = [1, 0], sizes = [1, 128], strides = [1, 1]} : vector<4x128xf32> to vector<1x128xf32>
    %5 = arith.addf %3, %4 : vector<1x128xf32>
    %6 = vector.extract_strided_slice %2 {offsets = [2, 0], sizes = [1, 128], strides = [1, 1]} : vector<4x128xf32> to vector<1x128xf32>
    %7 = arith.addf %5, %6 : vector<1x128xf32>
    %8 = vector.extract_strided_slice %2 {offsets = [3, 0], sizes = [1, 128], strides = [1, 1]} : vector<4x128xf32> to vector<1x128xf32>
    %9 = arith.addf %7, %8 : vector<1x128xf32>
    %10 = tpu.concatenate %7, %9, %9, %9 in 0 : vector<1x128xf32>, vector<1x128xf32>, vector<1x128xf32>, vector<1x128xf32> -> vector<4x128xf32>
    %cst = arith.constant 2.000000e-05 : f32
    %11 = vector.broadcast %cst : f32 to vector<4x128xf32>
    %12 = arith.mulf %10, %11 : vector<4x128xf32>
    %cst_2 = arith.constant 1.000000e+00 : f32
    %13 = vector.broadcast %cst_2 : f32 to vector<4x128xf32>
    %14 = arith.addf %12, %13 : vector<4x128xf32>
    %15 = math.rsqrt %14 : vector<4x128xf32>
    %16 = math.sqrt %15 : vector<4x128xf32>
    %17 = arith.mulf %15, %16 : vector<4x128xf32>
    %18 = arith.mulf %1, %17 : vector<4x128xf32>
    %c0_3 = arith.constant 0 : index
    %c0_4 = arith.constant 0 : index
    %c0_5 = arith.constant 0 : index
    %19 = vector.load %arg3[%c0_3, %c0_4, %c0_5] : memref<2x4x128xf32, #tpu.memory_space<vmem>>, vector<1x4x128xf32>
    %20 = vector.shape_cast %19 : vector<1x4x128xf32> to vector<4x128xf32>
    %21 = vector.shape_cast %18 : vector<4x128xf32> to vector<1x4x128xf32>
    tpu.vector_store %arg3[%c0_3, %c0_4, %c0_5], %21 {strides = array<i32>} : memref<2x4x128xf32, #tpu.memory_space<vmem>>, vector<1x4x128xf32>,
    %c1 = arith.constant 1 : index
    %c0_6 = arith.constant 0 : index
    %c0_7 = arith.constant 0 : index
    %22 = vector.load %arg2[%c1, %c0_6, %c0_7] : memref<2x4x128xf32, #tpu.memory_space<vmem>>, vector<1x4x128xf32>
    %23 = vector.shape_cast %22 : vector<1x4x128xf32> to vector<4x128xf32>
    %24 = arith.mulf %23, %23 : vector<4x128xf32>
    %25 = vector.extract_strided_slice %24 {offsets = [0, 0], sizes = [1, 128], strides = [1, 1]} : vector<4x128xf32> to vector<1x128xf32>
    %26 = vector.extract_strided_slice %24 {offsets = [1, 0], sizes = [1, 128], strides = [1, 1]} : vector<4x128xf32> to vector<1x128xf32>
    %27 = arith.addf %25, %26 : vector<1x128xf32>
    %28 = vector.extract_strided_slice %24 {offsets = [2, 0], sizes = [1, 128], strides = [1, 1]} : vector<4x128xf32> to vector<1x128xf32>
    %29 = arith.addf %27, %28 : vector<1x128xf32>
    %30 = vector.extract_strided_slice %24 {offsets = [3, 0], sizes = [1, 128], strides = [1, 1]} : vector<4x128xf32> to vector<1x128xf32>
    %31 = arith.addf %29, %30 : vector<1x128xf32>
    %32 = tpu.concatenate %29, %31, %31, %31 in 0 : vector<1x128xf32>, vector<1x128xf32>, vector<1x128xf32>, vector<1x128xf32> -> vector<4x128xf32>
    %cst_8 = arith.constant 2.000000e-05 : f32
    %33 = vector.broadcast %cst_8 : f32 to vector<4x128xf32>
    %34 = arith.mulf %32, %33 : vector<4x128xf32>
    %cst_9 = arith.constant 1.000000e+00 : f32
    %35 = vector.broadcast %cst_9 : f32 to vector<4x128xf32>
    %36 = arith.addf %34, %35 : vector<4x128xf32>
    %37 = math.rsqrt %36 : vector<4x128xf32>
    %38 = math.sqrt %37 : vector<4x128xf32>
    %39 = arith.mulf %37, %38 : vector<4x128xf32>
    %40 = arith.mulf %23, %39 : vector<4x128xf32>
    %c1_10 = arith.constant 1 : index
    %c0_11 = arith.constant 0 : index
    %c0_12 = arith.constant 0 : index
    %41 = vector.load %arg3[%c1_10, %c0_11, %c0_12] : memref<2x4x128xf32, #tpu.memory_space<vmem>>, vector<1x4x128xf32>
    %42 = vector.shape_cast %41 : vector<1x4x128xf32> to vector<4x128xf32>
    %43 = vector.shape_cast %40 : vector<4x128xf32> to vector<1x4x128xf32>
    tpu.vector_store %arg3[%c1_10, %c0_11, %c0_12], %43 {strides = array<i32>} : memref<2x4x128xf32, #tpu.memory_space<vmem>>, vector<1x4x128xf32>,
    return
  }
  func.func @transform_0(%arg0: i32, %arg1: i32) -> (i32, i32, i32) {
    %c0_i32 = arith.constant 0 : i32
    %c0_i32_0 = arith.constant 0 : i32
    return %arg0, %c0_i32, %arg1 : i32, i32, i32
  }
  func.func @transform_1(%arg0: i32, %arg1: i32) -> (i32, i32, i32) {
    %c0_i32 = arith.constant 0 : i32
    %c0_i32_0 = arith.constant 0 : i32
    return %arg0, %c0_i32, %arg1 : i32, i32, i32
  }
}

</mosaic_0001>

<llo_original>
// kernel: tpu_custom_call.1
$region0: #{tpu_custom_call.1}
  #allocation0 [shape = 'u32[]', space=smem, size = 0x4, offset = 0x4, fixed_abs, tag = 'smem constant byte address 0x4 - core index']
  #allocation1 [shape = 'u32[144,128]{1,0:T(1,128)}', space=vmem, size = 0x12000, scoped, tag = 'internal scratch']
  %s0 = inlined_call_operand.hbm [shape: f32[2,4,256], index: 0, kind: input, shape index: {}]
  %s1 = inlined_call_operand.hbm [shape: f32[2,4,256], index: 1, kind: output, shape index: {}]
  %s2 = sld [smem:[#allocation0]]
  $region41: #{tpu_custom_call.1} parent=0
    _
  %s4 = ssub.s32 1, %s2
  %s5 = scalar_select 0, %s4, %s2
  $region1: #{tpu_custom_call.1} parent=0
    #allocation2 [shape = 'u8[8192]{0}', space=vmem, size = 0x2000, scoped, tag = 'input window, operand 0']
    #allocation3 [shape = 's32[2]{0}', space=sflag, size = 0x8, scoped, tag = 'scoped memory for tpu_custom_call.1']
    #allocation4 [shape = 's32[2]{0}', space=sflag, size = 0x8, scoped, tag = 'scoped memory for tpu_custom_call.1']
    #allocation5 [shape = 'u8[8192]{0}', space=vmem, size = 0x2000, scoped, tag = 'output window, operand 0']
    %6 = vsyncpa [#allocation3], 0
    %s7 = scalar_lea.sflag [#allocation3], 1
    %8 = vsyncpa %s7, 0
    %9 = vsyncpa [#allocation4], 0
    %s10 = scalar_lea.sflag [#allocation4], 1
    %11 = vsyncpa %s10, 0
    loop: start=0, step=1, limit=4
    $region2: #{tpu_custom_call.1} parent=1 // loop_pre_header
      _
    $region3: #{tpu_custom_call.1} parent=1 // loop_header
      %s13 = sphi 0, %s17
      %p14 = scmp.ge.s32.totalorder %s13, 4
      %s20 = sphi 0, %s32
      %s21 = sphi 0, %s28
      %s22 = sphi 0, %s20
      %s23 = sphi 0, %s21
      %s24 = sphi 0, %s22
      %s25 = sphi 0, %s23
      %s37 = sphi 0, %s39
      %s40 = sphi 0, %s37
      %s41 = sphi 0, %s40
      %s57 = sphi 0, %s41
      %s65 = sphi 0, %s67
      %s68 = sphi 0, %s65
      %s69 = sphi 0, %s68
      %s85 = sphi 0, %s69
    $region4: #{tpu_custom_call.1} parent=1 // loop_header_branch
      %16 = sbr.rel (%p14) target = $region8
    $region5: #{tpu_custom_call.1} parent=1 // loop_body
      %s18 = ssub.s32 %s13, 1
      %s19 = ssub.s32 %s13, 2
      %s26 = sadd.s32 1, %s21
      %p27 = scmp.ge.s32.totalorder %s26, 2
      %s28 = scalar_select %p27, 0, %s26
      %s29 = sadd.s32 1, %s20
      %s30 = scalar_select %p27, %s29, %s20
      %p31 = scmp.ge.s32.totalorder %s30, 1
      %s32 = scalar_select %p31, 0, %s30
      %s33 = ssub.s32 %s20, %s32
      %s34 = ssub.s32 %s21, %s28
      %s35 = sor.u32 %s33, %s34
      %p36 = scmp.eq.s32.totalorder %s35, 0
      %s38 = sadd.s32 %s37, 1
      %s39 = scalar_select %p36, %s37, %s38
      %p42 = pneg %p36
      %p43 = scmp.eq.s32.totalorder %s13, 1
      %p44 = por %p42, %p43
      %p45 = scmp.ne.s32.totalorder %s37, %s40
      %p46 = scmp.eq.s32.totalorder %s13, 0
      %p47 = por %p45, %p46
      %p48 = scmp.ne.s32.totalorder %s37, %s40
      %p49 = scmp.eq.s32.totalorder %s18, 1
      %p50 = por %p48, %p49
      %p51 = scmp.ne.s32.totalorder %s40, %s41
      %p52 = scmp.eq.s32.totalorder %s18, 0
      %p53 = por %p51, %p52
      %p54 = scmp.ne.s32.totalorder %s40, %s41
      %p55 = scmp.eq.s32.totalorder %s19, 1
      %p56 = por %p54, %p55
      %p58 = scmp.ne.s32.totalorder %s41, %s57
      %p59 = scmp.eq.s32.totalorder %s19, 0
      %p60 = por %p58, %p59
      %s61 = ssub.s32 %s20, %s32
      %s62 = ssub.s32 %s21, %s28
      %s63 = sor.u32 %s61, %s62
      %p64 = scmp.eq.s32.totalorder %s63, 0
      %s66 = sadd.s32 %s65, 1
      %s67 = scalar_select %p64, %s65, %s66
      %p70 = pneg %p64
      %p71 = scmp.eq.s32.totalorder %s13, 1
      %p72 = por %p70, %p71
      %p73 = scmp.ne.s32.totalorder %s65, %s68
      %p74 = scmp.eq.s32.totalorder %s13, 0
      %p75 = por %p73, %p74
      %p76 = scmp.ne.s32.totalorder %s65, %s68
      %p77 = scmp.eq.s32.totalorder %s18, 1
      %p78 = por %p76, %p77
      %p79 = scmp.ne.s32.totalorder %s68, %s69
      %p80 = scmp.eq.s32.totalorder %s18, 0
      %p81 = por %p79, %p80
      %p82 = scmp.ne.s32.totalorder %s68, %s69
      %p83 = scmp.eq.s32.totalorder %s19, 1
      %p84 = por %p82, %p83
      %p86 = scmp.ne.s32.totalorder %s69, %s85
      %p87 = scmp.eq.s32.totalorder %s19, 0
      %p88 = por %p86, %p87
      %p89 = scmp.le.s32.totalorder 1, %s13
      %p90 = scmp.lt.s32.totalorder %s13, 3
      %p91 = pnand %p89, %p90
      %p92 = pneg %p91
      // Predicated region
      $region9: #{tpu_custom_call.1} parent=5 // pred_check
        _
      $region10: #{tpu_custom_call.1} parent=5 // pred_check_branch
        %94 = sbr.rel (%p91) target = $region12
      $region11: #{tpu_custom_call.1} parent=5 // pred_region
        %s95 = ssub.s32 %s13, 1
      $region12: #{tpu_custom_call.1} parent=5 // pred_fallthru
        _
      %p96 = scmp.lt.s32.totalorder %s13, 2
      // Predicated region
      $region13: #{tpu_custom_call.1} parent=5 // pred_check
        %p97 = pneg %p96
      $region14: #{tpu_custom_call.1} parent=5 // pred_check_branch
        %99 = sbr.rel (%p97) target = $region16
      $region15: #{tpu_custom_call.1} parent=5 // pred_region
        // Predicated region
        $region17: #{tpu_custom_call.1} parent=15 // pred_check
          %p100 = pneg %p47
        $region18: #{tpu_custom_call.1} parent=15 // pred_check_branch
          %102 = sbr.rel (%p100) target = $region20
        $region19: #{tpu_custom_call.1} parent=15 // pred_region
          %s103 = sand.u32 %s37, 1
          %s104 = scalar_lea.sflag [#allocation3], %s103
          %s105 = sand.u32 %s37, 1
          %s106 = smul.addr %s105, 8
          %s107 = scalar_lea.vmem [#allocation2], %s106
          %s108 = smul.u32 2, %s20
          %s110 = ssub.s32 128, 128
          %111 = vsyncadd %s104, %s110
          %s112 = smul.addr %s108, 2
          %s113 = sadd.s32 %s21, %s112
          %s114 = smul.addr %s113, 64
          %s115 = scalar_lea.hbm %s0, %s114
          %s116 = sshll.u32 %s107, 4
          %s117 = int_to_ptr.vmem [resolvable:$true] %s116
          %122 = dma.hbm_to_vmem [thread:$0]  %s115, 128, %s117, %s104, 128, 64, 4
        $region20: #{tpu_custom_call.1} parent=15 // pred_fallthru
          _
      $region16: #{tpu_custom_call.1} parent=5 // pred_fallthru
        _
      %p123 = scmp.le.s32.totalorder 1, %s13
      %p124 = scmp.lt.s32.totalorder %s13, 3
      %p125 = pnand %p123, %p124
      %p126 = pneg %p125
      // Predicated region
      $region21: #{tpu_custom_call.1} parent=5 // pred_check
        _
      $region22: #{tpu_custom_call.1} parent=5 // pred_check_branch
        %128 = sbr.rel (%p125) target = $region24
      $region23: #{tpu_custom_call.1} parent=5 // pred_region
        %s129 = ssub.s32 %s13, 1
        %s130 = sand.u32 %s40, 1
        %s131 = scalar_lea.sflag [#allocation3], %s130
        %s132 = sand.u32 %s40, 1
        %s133 = smul.addr %s132, 8
        %s134 = scalar_lea.vmem [#allocation2], %s133
        // Predicated region
        $region25: #{tpu_custom_call.1} parent=23 // pred_check
          %p135 = pneg %p53
        $region26: #{tpu_custom_call.1} parent=23 // pred_check_branch
          %137 = sbr.rel (%p135) target = $region28
        $region27: #{tpu_custom_call.1} parent=23 // pred_region
          %138 = dma.done %s131, 128
        $region28: #{tpu_custom_call.1} parent=23 // pred_fallthru
          _
        %s139 = sand.u32 %s40, 1
        %s140 = scalar_lea.sflag [#allocation3], %s139
        %s141 = sand.u32 %s40, 1
        %s142 = smul.addr %s141, 8
        %s143 = scalar_lea.vmem [#allocation2], %s142
        %p144 = pneg %p53
        %p145 = pneg %p50
        %p146 = pneg %p81
        %p147 = pneg %p78
        %s148 = sand.u32 %s68, 1
        %s149 = scalar_lea.sflag [#allocation4], %s148
        %s150 = sand.u32 %s68, 1
        %s151 = smul.addr %s150, 8
        %s152 = scalar_lea.vmem [#allocation5], %s151
        %s153 = smul.u32 2, %s22
        %s154 = smul.u32 2, %s22
        %v155 = vld [vmem:[%s134] sm:$0xf]
        %v156 = vmul.f32 %v155, %v155
        %v158 = vrot.slane %v156, 1
        %v160 = vadd.f32 %v156, %v158
        %v161 = vrot.slane %v156, 2
        %v163 = vadd.f32 %v160, %v161
        %v164 = vrot.slane %v156, 3
        %v166 = vadd.f32 %v163, %v164
        %v168 = vrot.slane %v166, 7
        %v170 = vrot.slane %v166, 6
        %v172 = vrot.slane %v166, 5
        %vm174 = vcmask 1040384
        %v175 = vsel %vm174, %v163, %v168
        %vm176 = vcmask 1041408
        %v177 = vsel %vm176, %v175, %v170
        %vm178 = vcmask 1042432
        %v179 = vsel %vm178, %v177, %v172
        %v180 = vmul.f32 %v179, 2e-05
        %v181 = vadd.f32 %v180, 1.0
        %v182 = vrsqrt.pop %v181
        %v183 = vrsqrt.pop %v182
        %v184 = vmul.f32 %v182, %v183
        %vm185 = vcmp.eq.f32.partialorder %v182, inf
        %v186 = vsel %vm185, %v182, %v184
        %vm187 = vcmp.eq.f32.partialorder %v182, 0.0
        %v188 = vand.u32 %v182, 2147483648
        %v189 = vsel %vm187, %v188, %v186
        %v190 = vmul.f32 %v182, %v189
        %v191 = vmul.f32 %v155, %v190
        %192 = vst [vmem:[%s152] sm:$0xf] %v191
        %s193 = scalar_lea.vmem %s134, 4 [#allocation2]
        %v194 = vld [vmem:[%s193] sm:$0xf]
        %v195 = vmul.f32 %v194, %v194
        %v197 = vrot.slane %v195, 1
        %v199 = vadd.f32 %v195, %v197
        %v200 = vrot.slane %v195, 2
        %v202 = vadd.f32 %v199, %v200
        %v203 = vrot.slane %v195, 3
        %v205 = vadd.f32 %v202, %v203
        %v207 = vrot.slane %v205, 7
        %v209 = vrot.slane %v205, 6
        %v211 = vrot.slane %v205, 5
        %v213 = vsel %vm174, %v202, %v207
        %v214 = vsel %vm176, %v213, %v209
        %v215 = vsel %vm178, %v214, %v211
        %v216 = vmul.f32 %v215, 2e-05
        %v217 = vadd.f32 %v216, 1.0
        %v218 = vrsqrt.pop %v217
        %v219 = vrsqrt.pop %v218
        %v220 = vmul.f32 %v218, %v219
        %vm221 = vcmp.eq.f32.partialorder %v218, inf
        %v222 = vsel %vm221, %v218, %v220
        %vm223 = vcmp.eq.f32.partialorder %v218, 0.0
        %v224 = vand.u32 %v218, 2147483648
        %v225 = vsel %vm223, %v224, %v222
        %v226 = vmul.f32 %v218, %v225
        %v227 = vmul.f32 %v194, %v226
        %s228 = scalar_lea.vmem %s152, 4 [#allocation5]
        %229 = vst [vmem:[%s228] sm:$0xf] %v227
        %s230 = sand.u32 %s68, 1
        %s231 = scalar_lea.sflag [#allocation4], %s230
        %s232 = sand.u32 %s68, 1
        %s233 = smul.addr %s232, 8
        %s234 = scalar_lea.vmem [#allocation5], %s233
        // Predicated region
        $region29: #{tpu_custom_call.1} parent=23 // pred_check
          %p235 = pneg %p78
        $region30: #{tpu_custom_call.1} parent=23 // pred_check_branch
          %237 = sbr.rel (%p235) target = $region32
        $region31: #{tpu_custom_call.1} parent=23 // pred_region
          %s238 = smul.u32 2, %s22
          %s240 = ssub.s32 128, 128
          %241 = vsyncadd %s231, %s240
          %s242 = smul.addr %s238, 2
          %s243 = sadd.s32 %s23, %s242
          %s244 = smul.addr %s243, 64
          %s245 = scalar_lea.hbm %s1, %s244
          %s246 = sshll.u32 %s234, 4
          %s247 = int_to_ptr.vmem [resolvable:$true] %s246
          %252 = dma.vmem_to_hbm [thread:$0]  %s247, 128, %s245, %s231, 64, 128, 4
        $region32: #{tpu_custom_call.1} parent=23 // pred_fallthru
          _
      $region24: #{tpu_custom_call.1} parent=5 // pred_fallthru
        _
      %p253 = scmp.le.s32.totalorder 2, %s13
      // Predicated region
      $region33: #{tpu_custom_call.1} parent=5 // pred_check
        %p254 = pneg %p253
      $region34: #{tpu_custom_call.1} parent=5 // pred_check_branch
        %256 = sbr.rel (%p254) target = $region36
      $region35: #{tpu_custom_call.1} parent=5 // pred_region
        %s257 = ssub.s32 %s13, 2
        // Predicated region
        $region37: #{tpu_custom_call.1} parent=35 // pred_check
          %p258 = pneg %p84
        $region38: #{tpu_custom_call.1} parent=35 // pred_check_branch
          %260 = sbr.rel (%p258) target = $region40
        $region39: #{tpu_custom_call.1} parent=35 // pred_region
          %s261 = sand.u32 %s69, 1
          %s262 = scalar_lea.sflag [#allocation4], %s261
          %s263 = sand.u32 %s69, 1
          %s264 = smul.addr %s263, 8
          %s265 = scalar_lea.vmem [#allocation5], %s264
          %266 = dma.done %s262, 128
        $region40: #{tpu_custom_call.1} parent=35 // pred_fallthru
          _
      $region36: #{tpu_custom_call.1} parent=5 // pred_fallthru
        _
    $region6: #{tpu_custom_call.1} parent=1 // loop_footer
      %s17 = sadd.s32 1, %s13
    $region7: #{tpu_custom_call.1} parent=1 // loop_footer_branch
      %12 = sbr.rel target = $region3
    $region8: #{tpu_custom_call.1} parent=1 // loop_exit
      _
    %267 = vsyncpa [#allocation3], 1
    %s268 = scalar_lea.sflag [#allocation3], 1
    %269 = vsyncpa %s268, 1
    %270 = vsyncpa [#allocation4], 1
    %s271 = scalar_lea.sflag [#allocation4], 1
    %272 = vsyncpa %s271, 1

</llo_original>
